<compile_context>
chip_gen: v6e
topology: v6e:2x2x1
jax: 0.10.0
libtpu: 0.0.40
codegen_flags: <defaults>
</compile_context>

<pallas_src>
import functools

import jax
import jax.numpy as jnp
from jax import lax
from jax.experimental import pallas as pl
from jax.experimental.pallas import tpu as pltpu


# Contract last dim of both operands: A @ B.T without materializing B.T.
_DOT_DIMS = (((1,), (1,)), ((), ()))
_F32_TINY = float(jnp.finfo(jnp.float32).tiny)


# --------------------------------------------------------------------------- #
# In-kernel helpers
# --------------------------------------------------------------------------- #
def _weight_tile(sk, row0, tm, n, inv_gamma):
    """softmax(dim=-1)(masked/gamma) / row-max  ==  exp(x - rowmax(x)) (exact algebra)."""
    rows = lax.broadcasted_iota(jnp.int32, (tm, 1), 0) + row0        # [TM, 1]
    cols = lax.broadcasted_iota(jnp.int32, (1, n), 1)                # [1,  N]
    diag = rows == cols                                              # broadcast -> [TM, N] bool
    wseed = jnp.where(diag, jnp.float32(-10.0), sk) * jnp.float32(inv_gamma)
    return jnp.exp(wseed - jnp.max(wseed, axis=1, keepdims=True))


def _row_softmax_and_log(s):
    """Row softmax and log-softmax sharing one exp and one max/sum pair."""
    m = jnp.max(s, axis=1, keepdims=True)
    z = s - m
    e = jnp.exp(z)
    l = jnp.sum(e, axis=1, keepdims=True)
    p = e * pl.reciprocal(l, approx=True)          # EUP reciprocal on [TM,1] + VALU multiply
    logp = z - jnp.log(l)                          # log-softmax identity
    return p, logp


def _src_loss_kernel(qn_ref, kn_ref, lp_ref, w_ref, *, inv_gamma, tm):
    i = pl.program_id(0)
    n = kn_ref.shape[0]
    row0 = pl.multiple_of(i * tm, tm)

    # ---- k branch first (sk feeds both the weight and p2) -------------------
    kn = kn_ref[...]                                   # resident bf16 [N, Cp]
    kn_t = kn_ref[pl.ds(row0, tm), :]                  # bf16 row slab [TM, Cp]
    sk = lax.dot_general(kn_t, kn, _DOT_DIMS,
                         preferred_element_type=jnp.float32)         # [TM, N] f32

    # Weight output tile (lane-dense: last dim = N); stored immediately so it dies.
    w_ref[...] = _weight_tile(sk, row0, tm, n, inv_gamma).astype(w_ref.dtype)

    # JSD: axis-0 softmax == transposed axis-1 softmax on a symmetric Gram matrix,
    # and the all-element sum is transpose-invariant -> reduce along the lane axis.
    p2, logp2 = _row_softmax_and_log(sk)
    s2 = jnp.sum(p2 * logp2)                           # logp2 / sk die here

    # ---- q branch ------------------------------------------------------------
    qn = qn_ref[...]
    qn_t = qn_ref[pl.ds(row0, tm), :]
    sq = lax.dot_general(qn_t, qn, _DOT_DIMS,
                         preferred_element_type=jnp.float32)         # [TM, N] f32
    p1, logp1 = _row_softmax_and_log(sq)
    s1 = jnp.sum(p1 * logp1)                           # logp1 / sq die here

    # ---- merge: 0.5*(S1+S2) - sum(m*log m)  ==  0.5*sum(p1*(logp1-logm)+p2*(...)) --
    m = 0.5 * (p1 + p2)
    logm = jnp.log(jnp.maximum(m, jnp.float32(_F32_TINY)))   # underflow guard
    partial = 0.5 * (s1 + s2) - jnp.sum(m * logm)

    # Per-tile partial (summed in the wrapper) -> grid axis stays fully parallel.
    lp_ref[...] = partial + jnp.zeros(lp_ref.shape, jnp.float32)


def _src_weight_kernel(kn_ref, w_ref, *, inv_gamma, tm):
    """only_weight=True path: no q Gram, no softmaxes, no JSD."""
    i = pl.program_id(0)
    n = kn_ref.shape[0]
    row0 = pl.multiple_of(i * tm, tm)
    kn = kn_ref[...]
    kn_t = kn_ref[pl.ds(row0, tm), :]
    sk = lax.dot_general(kn_t, kn, _DOT_DIMS, preferred_element_type=jnp.float32)
    w_ref[...] = _weight_tile(sk, row0, tm, n, inv_gamma).astype(w_ref.dtype)


# --------------------------------------------------------------------------- #
# Wrapper-side sizing helpers
# --------------------------------------------------------------------------- #
def _vmem_budget_cap():
    """Per-generation scoped-VMEM budget (leaves headroom under physical VMEM)."""
    try:
        cap = int(pltpu.get_tpu_info().vmem_capacity_bytes)
    except Exception:
        cap = 64 << 20                       # conservative fallback
    if cap >= (100 << 20):                   # v5e / v6e: 128 MiB physical
        return 96 << 20
    return 40 << 20                          # v7x: 64 MiB physical


def _working_set_bytes(n, c_pad, tm, w_bytes):
    resident_in = 2 * 2 * n * c_pad * 2      # qn, kn (bf16), x2 buffering slack
    w_out = 2 * tm * n * w_bytes             # double-buffered weight slab
    lp_out = 2 * 8 * 128 * 4                 # double-buffered loss partial
    live = 6 * tm * n * 4                    # peak live f32 [TM, N] temporaries (+slack)
    return resident_in + w_out + lp_out + live + (2 << 20)


def _pick_row_tile(n, c_pad, w_bytes, cap):
    for tm in (256, 128, 64, 32, 16, 8):     # biggest slab that divides N and fits budget
        if n % tm == 0 and _working_set_bytes(n, c_pad, tm, w_bytes) <= cap:
            return tm
    for tm in (8, 16, 32, 64, 128, 256):     # smallest divisor as last resort
        if n % tm == 0:
            return tm
    return n                                 # odd sizes: single full-array block


def _prep_features(x, c_pad):
    """Exact PyTorch Normalize(power=2), then bf16 MXU operand + lane padding."""
    x = x.astype(jnp.float32)
    norm = jnp.sqrt(jnp.sum(x * x, axis=1, keepdims=True))
    xn = x / (norm + jnp.float32(1e-7))
    xn = xn.astype(jnp.bfloat16)
    c = x.shape[1]
    if c_pad != c:
        xn = jnp.pad(xn, ((0, 0), (0, c_pad - c)))   # zero channels: no effect on Gram
    return xn


# --------------------------------------------------------------------------- #
# Module
# --------------------------------------------------------------------------- #
class SRCLossPallas:
    """Mirror of the PyTorch SRC_Loss module (no learnable parameters)."""

    def __init__(self, n_patches, HDCE_gamma, use_curriculum, HDCE_gamma_min,
                 n_epochs, n_epochs_decay, step_gamma, step_gamma_epoch,
                 weight_dtype=jnp.bfloat16):
        self.n_patches = n_patches
        self.HDCE_gamma = HDCE_gamma
        self.use_curriculum = use_curriculum
        self.HDCE_gamma_min = HDCE_gamma_min
        self.n_epochs = n_epochs if n_epochs is not None else 10
        self.n_epochs_decay = n_epochs_decay if n_epochs_decay is not None else 10
        self.step_gamma = step_gamma
        self.step_gamma_epoch = step_gamma_epoch
        # bf16 weight writeback halves the dominant N^2 HBM traffic; f32 selectable.
        self.weight_dtype = weight_dtype

    def _gamma(self, epoch):
        gamma = self.HDCE_gamma
        if self.use_curriculum:
            gamma = gamma + (self.HDCE_gamma_min - gamma) * epoch / (
                self.n_epochs + self.n_epochs_decay)
            if self.step_gamma & (epoch > self.step_gamma_epoch):  # mirrors PyTorch
                gamma = 1.0
        return float(gamma)

    def __call__(self, feat_q, feat_k, only_weight=False, epoch=None):
        n, c = feat_q.shape
        inv_gamma = 1.0 / self._gamma(epoch)   # static; curriculum gamma -> recompile per epoch
        c_pad = max(128, ((c + 127) // 128) * 128)
        w_bytes = jnp.dtype(self.weight_dtype).itemsize

        cap = _vmem_budget_cap()
        tm = _pick_row_tile(n, c_pad, w_bytes, cap)
        grid = (n // tm,)
        vmem_limit = int(min(cap, max(_working_set_bytes(n, c_pad, tm, w_bytes) + (4 << 20),
                                      32 << 20)))

        full_spec = pl.BlockSpec((n, c_pad), lambda i: (0, 0))   # resident across the grid
        w_spec = pl.BlockSpec((tm, n), lambda i: (i, 0))         # lane-dense row slab

        kn = _prep_features(feat_k, c_pad)

        if only_weight:
            kernel = functools.partial(_src_weight_kernel, inv_gamma=inv_gamma, tm=tm)
            weight_out = pl.pallas_call(
                kernel,
                out_shape=jax.ShapeDtypeStruct((n, n), self.weight_dtype),
                grid=grid,
                in_specs=[full_spec],
                out_specs=w_spec,
                compiler_params=pltpu.CompilerParams(
                    dimension_semantics=("parallel",),
                    vmem_limit_bytes=vmem_limit),
            )(kn)
            return 0, weight_out[None, :, :]

        qn = _prep_features(feat_q, c_pad)
        lp_spec = pl.BlockSpec((1, 8, 128), lambda i: (i, 0, 0))  # per-tile loss partial

        kernel = functools.partial(_src_loss_kernel, inv_gamma=inv_gamma, tm=tm)
        loss_parts, weight_out = pl.pallas_call(
            kernel,
            out_shape=(
                jax.ShapeDtypeStruct((grid[0], 8, 128), jnp.float32),
                jax.ShapeDtypeStruct((n, n), self.weight_dtype),
            ),
            grid=grid,
            in_specs=[full_spec, full_spec],
            out_specs=(lp_spec, w_spec),
            compiler_params=pltpu.CompilerParams(
                # Per-tile partials -> no cross-iteration state -> fully parallel
                # (shards across both v7x TensorCores; harmless on v5e/v6e).
                dimension_semantics=("parallel",),
                vmem_limit_bytes=vmem_limit),
        )(qn, kn)

        loss = jnp.sum(loss_parts[:, 0, 0])
        # Add back the batch_dim_for_bmm = 1 axis to match PyTorch's [1, N, N].
        return loss, weight_out[None, :, :]


# --------------------------------------------------------------------------- #
# Pure-JAX reference (literal PyTorch forward) for sanity checking
# --------------------------------------------------------------------------- #
def _reference_jax(feat_q, feat_k, gamma):
    def normalize(x):
        return x / (jnp.sqrt(jnp.sum(x * x, axis=1, keepdims=True)) + 1e-7)

    qn = normalize(feat_q.astype(jnp.float32))
    kn = normalize(feat_k.astype(jnp.float32))
    sq = qn @ qn.T
    sk = kn @ kn.T
    n = sq.shape[0]
    diag = jnp.eye(n, dtype=bool)
    wseed = jnp.where(diag, -10.0, sk) / gamma
    w = jax.nn.softmax(wseed, axis=1)
    w = w / jnp.max(w, axis=1, keepdims=True)
    p1 = jax.nn.softmax(sq, axis=0)
    p2 = jax.nn.softmax(sk, axis=0)
    m = 0.5 * (p1 + p2)
    jsd = 0.5 * (jnp.sum(p1 * (jnp.log(p1) - jnp.log(m))) +
                 jnp.sum(p2 * (jnp.log(p2) - jnp.log(m))))
    return jsd, w


if __name__ == "__main__":
    N, C = 128, 64  # n_patches, feature dim (TPU-friendly small shapes)

    key = jax.random.PRNGKey(0)
    kq, kk = jax.random.split(key)
    feat_q = jax.random.normal(kq, (N, C), dtype=jnp.float32)
    feat_k = jax.random.normal(kk, (N, C), dtype=jnp.float32)

    module = SRCLossPallas(
        n_patches=N, HDCE_gamma=50.0, use_curriculum=True, HDCE_gamma_min=10.0,
        n_epochs=10, n_epochs_decay=10, step_gamma=False, step_gamma_epoch=200,
    )

    loss, weight_out = module(feat_q, feat_k, only_weight=False, epoch=3)
    jax.block_until_ready((loss, weight_out))

    zero, weight_only = module(feat_q, feat_k, only_weight=True, epoch=3)
    jax.block_until_ready(weight_only)

    # Sanity check vs pure-JAX reference. bf16 Gram operands, bf16 weight output and
    # the approx softmax reciprocal change rounding -> modest tolerances.
    ref_loss, ref_w = _reference_jax(feat_q, feat_k, module._gamma(3))
    w_f32 = weight_out[0].astype(jnp.float32)
    wo_f32 = weight_only[0].astype(jnp.float32)
    assert jnp.allclose(loss, ref_loss, rtol=2e-2, atol=1e-3), (loss, ref_loss)
    assert jnp.allclose(w_f32, ref_w, rtol=2e-2, atol=1e-2)
    assert jnp.allclose(wo_f32, ref_w, rtol=2e-2, atol=1e-2)
    assert zero == 0

    print("KERNEL_OK")
</pallas_src>

<mosaic_0001>
module attributes {stable_mosaic.version = 11 : i64} {
  func.func @_src_loss_kernel(%arg0: i32, %arg1: memref<128x128xbf16, #tpu.memory_space<vmem>>, %arg2: memref<128x128xbf16, #tpu.memory_space<vmem>>, %arg3: memref<1x8x128xf32, #tpu.memory_space<vmem>>, %arg4: memref<128x128xbf16, #tpu.memory_space<vmem>>) attributes {dimension_semantics = [#tpu.dimension_semantics<parallel>], iteration_bounds = array<i64: 1>, scalar_prefetch = 0 : i64, scratch_operands = 0 : i64, tpu.core_type = #tpu.core_type<tc>, window_params = [{pipeline_mode = #tpu.pipeline_mode<synchronous>, transform_indices = @transform_0, window_bounds = array<i64: 128, 128>}, {pipeline_mode = #tpu.pipeline_mode<synchronous>, transform_indices = @transform_1, window_bounds = array<i64: 128, 128>}, {transform_indices = @transform_2, window_bounds = array<i64: 1, 8, 128>}, {transform_indices = @transform_3, window_bounds = array<i64: 128, 128>}]} {
    %c128_i32 = arith.constant 128 : i32
    %0 = arith.muli %arg0, %c128_i32 : i32
    %1 = tpu.assume_multiple %0, 128 : i32
    %c0 = arith.constant 0 : index
    %c0_0 = arith.constant 0 : index
    %2 = vector.load %arg2[%c0, %c0_0] : memref<128x128xbf16, #tpu.memory_space<vmem>>, vector<128x128xbf16>
    %3 = arith.index_cast %1 : i32 to index
    %c0_1 = arith.constant 0 : index
    %4 = vector.load %arg2[%3, %c0_1] : memref<128x128xbf16, #tpu.memory_space<vmem>>, vector<128x128xbf16>
    %cst = arith.constant dense<0.000000e+00> : vector<128x128xf32>
    %5 = tpu.matmul %4, %2, %cst {dimension_numbers = #tpu.dot_dimension_numbers<[1], [1], [0], [0], [0, 0, 1, 0], [], []>} : vector<128x128xbf16>, vector<128x128xbf16>, vector<128x128xf32> -> vector<128x128xf32>
    %6 = tpu.iota {dimensions = array<i32: 0>} : vector<128x1xi32>
    %7 = vector.broadcast %1 : i32 to vector<128x1xi32>
    %8 = arith.addi %6, %7 : vector<128x1xi32>
    %9 = tpu.iota {dimensions = array<i32: 1>} : vector<1x128xi32>
    %10 = vector.broadcast %8 : vector<128x1xi32> to vector<128x128xi32>
    %11 = vector.broadcast %9 : vector<1x128xi32> to vector<128x128xi32>
    %12 = arith.cmpi eq, %10, %11 : vector<128x128xi32>
    %cst_2 = arith.constant -1.000000e+01 : f32
    %13 = vector.broadcast %cst_2 : f32 to vector<128x128xf32>
    %14 = arith.select %12, %13, %5 : vector<128x128xi1>, vector<128x128xf32>
    %cst_3 = arith.constant 0.0227272734 : f32
    %15 = vector.broadcast %cst_3 : f32 to vector<128x128xf32>
    %16 = arith.mulf %14, %15 : vector<128x128xf32>
    %cst_4 = arith.constant dense<0xFF800000> : vector<128xf32>
    %17 = vector.multi_reduction <maximumf>, %16, %cst_4 [1] : vector<128x128xf32> to vector<128xf32>
    %18 = vector.shape_cast %17 : vector<128xf32> to vector<128x1xf32>
    %19 = vector.broadcast %18 : vector<128x1xf32> to vector<128x128xf32>
    %20 = arith.subf %16, %19 : vector<128x128xf32>
    %21 = math.exp %20 : vector<128x128xf32>
    %22 = arith.truncf %21 : vector<128x128xf32> to vector<128x128xbf16>
    %c0_5 = arith.constant 0 : index
    %c0_6 = arith.constant 0 : index
    %23 = vector.load %arg4[%c0_5, %c0_6] : memref<128x128xbf16, #tpu.memory_space<vmem>>, vector<128x128xbf16>
    tpu.vector_store %arg4[%c0_5, %c0_6], %22 {strides = array<i32>} : memref<128x128xbf16, #tpu.memory_space<vmem>>, vector<128x128xbf16>,
    %cst_7 = arith.constant dense<0xFF800000> : vector<128xf32>
    %24 = vector.multi_reduction <maximumf>, %5, %cst_7 [1] : vector<128x128xf32> to vector<128xf32>
    %25 = vector.shape_cast %24 : vector<128xf32> to vector<128x1xf32>
    %26 = vector.broadcast %25 : vector<128x1xf32> to vector<128x128xf32>
    %27 = arith.subf %5, %26 : vector<128x128xf32>
    %28 = math.exp %27 : vector<128x128xf32>
    %cst_8 = arith.constant dense<0.000000e+00> : vector<128xf32>
    %29 = vector.multi_reduction <add>, %28, %cst_8 [1] : vector<128x128xf32> to vector<128xf32>
    %30 = vector.shape_cast %29 : vector<128xf32> to vector<128x1xf32>
    %31 = tpu.reciprocal %30 {approx = true} : vector<128x1xf32> -> vector<128x1xf32>
    %32 = vector.broadcast %31 : vector<128x1xf32> to vector<128x128xf32>
    %33 = arith.mulf %28, %32 : vector<128x128xf32>
    %34 = math.log %30 : vector<128x1xf32>
    %35 = vector.broadcast %34 : vector<128x1xf32> to vector<128x128xf32>
    %36 = arith.subf %27, %35 : vector<128x128xf32>
    %37 = arith.mulf %33, %36 : vector<128x128xf32>
    %38 = vector.shape_cast %37 : vector<128x128xf32> to vector<1x128x128xf32>
    %cst_9 = arith.constant dense<0.000000e+00> : vector<1xf32>
    %39 = vector.multi_reduction <add>, %38, %cst_9 [1, 2] : vector<1x128x128xf32> to vector<1xf32>
    %40 = vector.shape_cast %39 : vector<1xf32> to vector<1x1x1xf32>
    %41 = vector.extract %40[0, 0, 0] : f32 from vector<1x1x1xf32>
    %c0_10 = arith.constant 0 : index
    %c0_11 = arith.constant 0 : index
    %42 = vector.load %arg1[%c0_10, %c0_11] : memref<128x128xbf16, #tpu.memory_space<vmem>>, vector<128x128xbf16>
    %43 = arith.index_cast %1 : i32 to index
    %c0_12 = arith.constant 0 : index
    %44 = vector.load %arg1[%43, %c0_12] : memref<128x128xbf16, #tpu.memory_space<vmem>>, vector<128x128xbf16>
    %cst_13 = arith.constant dense<0.000000e+00> : vector<128x128xf32>
    %45 = tpu.matmul %44, %42, %cst_13 {dimension_numbers = #tpu.dot_dimension_numbers<[1], [1], [0], [0], [0, 0, 1, 0], [], []>} : vector<128x128xbf16>, vector<128x128xbf16>, vector<128x128xf32> -> vector<128x128xf32>
    %cst_14 = arith.constant dense<0xFF800000> : vector<128xf32>
    %46 = vector.multi_reduction <maximumf>, %45, %cst_14 [1] : vector<128x128xf32> to vector<128xf32>
    %47 = vector.shape_cast %46 : vector<128xf32> to vector<128x1xf32>
    %48 = vector.broadcast %47 : vector<128x1xf32> to vector<128x128xf32>
    %49 = arith.subf %45, %48 : vector<128x128xf32>
    %50 = math.exp %49 : vector<128x128xf32>
    %cst_15 = arith.constant dense<0.000000e+00> : vector<128xf32>
    %51 = vector.multi_reduction <add>, %50, %cst_15 [1] : vector<128x128xf32> to vector<128xf32>
    %52 = vector.shape_cast %51 : vector<128xf32> to vector<128x1xf32>
    %53 = tpu.reciprocal %52 {approx = true} : vector<128x1xf32> -> vector<128x1xf32>
    %54 = vector.broadcast %53 : vector<128x1xf32> to vector<128x128xf32>
    %55 = arith.mulf %50, %54 : vector<128x128xf32>
    %56 = math.log %52 : vector<128x1xf32>
    %57 = vector.broadcast %56 : vector<128x1xf32> to vector<128x128xf32>
    %58 = arith.subf %49, %57 : vector<128x128xf32>
    %59 = arith.mulf %55, %58 : vector<128x128xf32>
    %60 = vector.shape_cast %59 : vector<128x128xf32> to vector<1x128x128xf32>
    %cst_16 = arith.constant dense<0.000000e+00> : vector<1xf32>
    %61 = vector.multi_reduction <add>, %60, %cst_16 [1, 2] : vector<1x128x128xf32> to vector<1xf32>
    %62 = vector.shape_cast %61 : vector<1xf32> to vector<1x1x1xf32>
    %63 = vector.extract %62[0, 0, 0] : f32 from vector<1x1x1xf32>
    %64 = arith.addf %55, %33 : vector<128x128xf32>
    %cst_17 = arith.constant 5.000000e-01 : f32
    %65 = vector.broadcast %cst_17 : f32 to vector<128x128xf32>
    %66 = arith.mulf %65, %64 : vector<128x128xf32>
    %cst_18 = arith.constant 1.17549435E-38 : f32
    %67 = vector.broadcast %cst_18 : f32 to vector<128x128xf32>
    %68 = arith.maximumf %66, %67 : vector<128x128xf32>
    %69 = math.log %68 : vector<128x128xf32>
    %70 = arith.addf %63, %41 : f32
    %cst_19 = arith.constant 5.000000e-01 : f32
    %71 = arith.mulf %cst_19, %70 : f32
    %72 = arith.mulf %66, %69 : vector<128x128xf32>
    %73 = vector.shape_cast %72 : vector<128x128xf32> to vector<1x128x128xf32>
    %cst_20 = arith.constant dense<0.000000e+00> : vector<1xf32>
    %74 = vector.multi_reduction <add>, %73, %cst_20 [1, 2] : vector<1x128x128xf32> to vector<1xf32>
    %75 = vector.shape_cast %74 : vector<1xf32> to vector<1x1x1xf32>
    %76 = vector.extract %75[0, 0, 0] : f32 from vector<1x1x1xf32>
    %77 = arith.subf %71, %76 : f32
    %cst_21 = arith.constant 0.000000e+00 : f32
    %78 = vector.broadcast %cst_21 : f32 to vector<1x8x128xf32>
    %79 = vector.broadcast %77 : f32 to vector<1x8x128xf32>
    %80 = arith.addf %79, %78 : vector<1x8x128xf32>
    %c0_22 = arith.constant 0 : index
    %c0_23 = arith.constant 0 : index
    %c0_24 = arith.constant 0 : index
    %81 = vector.load %arg3[%c0_22, %c0_23, %c0_24] : memref<1x8x128xf32, #tpu.memory_space<vmem>>, vector<1x8x128xf32>
    tpu.vector_store %arg3[%c0_22, %c0_23, %c0_24], %80 {strides = array<i32>} : memref<1x8x128xf32, #tpu.memory_space<vmem>>, vector<1x8x128xf32>,
    return
  }
  func.func @transform_0(%arg0: i32) -> (i32, i32) {
    %c0_i32 = arith.constant 0 : i32
    %c0_i32_0 = arith.constant 0 : i32
    %c0_i32_1 = arith.constant 0 : i32
    return %c0_i32, %c0_i32_0 : i32, i32
  }
  func.func @transform_1(%arg0: i32) -> (i32, i32) {
    %c0_i32 = arith.constant 0 : i32
    %c0_i32_0 = arith.constant 0 : i32
    %c0_i32_1 = arith.constant 0 : i32
    return %c0_i32, %c0_i32_0 : i32, i32
  }
  func.func @transform_2(%arg0: i32) -> (i32, i32, i32) {
    %c0_i32 = arith.constant 0 : i32
    %c0_i32_0 = arith.constant 0 : i32
    %c0_i32_1 = arith.constant 0 : i32
    return %arg0, %c0_i32, %c0_i32_0 : i32, i32, i32
  }
  func.func @transform_3(%arg0: i32) -> (i32, i32) {
    %c0_i32 = arith.constant 0 : i32
    %c0_i32_0 = arith.constant 0 : i32
    return %arg0, %c0_i32 : i32, i32
  }
}

</mosaic_0001>

<llo_original>
// kernel: tpu_custom_call.1
$region0: #{tpu_custom_call.1}
  #allocation0 [shape = 'u32[]', space=smem, size = 0x4, offset = 0x4, fixed_abs, tag = 'smem constant byte address 0x4 - core index']
  #allocation1 [shape = 'u32[144,128]{1,0:T(1,128)}', space=vmem, size = 0x12000, scoped, tag = 'internal scratch']
  %s0 = inlined_call_operand.hbm [shape: bf16[128,128], index: 0, kind: input, shape index: {}]
  %s1 = inlined_call_operand.hbm [shape: bf16[128,128], index: 1, kind: input, shape index: {}]
  %s2 = inlined_call_operand.hbm [shape: f32[1,8,128], index: 2, kind: output, shape index: {0}]
  %s3 = inlined_call_operand.hbm [shape: bf16[128,128], index: 3, kind: output, shape index: {1}]
  %4 = xla_tuple %s2, %s3
  %s5 = sld [smem:[#allocation0]]
  $region34: #{tpu_custom_call.1} parent=0
    _
  %s7 = ssub.s32 1, %s5
  %s8 = scalar_select 0, %s7, %s5
  $region1: #{tpu_custom_call.1} parent=0
    #allocation2 [shape = 'u8[32768]{0}', space=vmem, size = 0x8000, scoped, tag = 'input window, operand 0, single buffered']
    #allocation3 [shape = 's32[1]{0}', space=sflag, size = 0x4, scoped, tag = 'scoped memory for tpu_custom_call.1']
    #allocation4 [shape = 's32[1]{0}', space=sflag, size = 0x4, scoped, tag = 'scoped memory for tpu_custom_call.1']
    #allocation5 [shape = 'u8[32768]{0}', space=vmem, size = 0x8000, scoped, tag = 'input window, operand 1, single buffered']
    #allocation6 [shape = 's32[1]{0}', space=sflag, size = 0x4, scoped, tag = 'scoped memory for tpu_custom_call.1']
    #allocation7 [shape = 'u8[4096]{0}', space=vmem, size = 0x1000, scoped, tag = 'output window, operand 0, single buffered']
    #allocation8 [shape = 'u8[32768]{0}', space=vmem, size = 0x8000, scoped, tag = 'output window, operand 1, single buffered']
    #allocation9 [shape = 's32[1]{0}', space=sflag, size = 0x4, scoped, tag = 'scoped memory for tpu_custom_call.1']
    %9 = vsyncpa [#allocation3], 0
    %10 = vsyncpa [#allocation6], 0
    %11 = vsyncpa [#allocation4], 0
    %12 = vsyncpa [#allocation9], 0
    // Predicated region
    $region2: #{tpu_custom_call.1} parent=1 // pred_check
      _
    $region3: #{tpu_custom_call.1} parent=1 // pred_check_branch
      %14 = sbr.rel (0) target = $region5
    $region4: #{tpu_custom_call.1} parent=1 // pred_region
      %s16 = ssub.s32 1024, 1024
      %17 = vsyncadd [#allocation3], %s16
      %s18 = sshll.u32 [#allocation2], 4
      %s19 = int_to_ptr.vmem [resolvable:$true] %s18
      %24 = dma.hbm_to_vmem [thread:$0]  %s0, 1024, %s19, [#allocation3], 64, 64, 4
    $region5: #{tpu_custom_call.1} parent=1 // pred_fallthru
      _
    // Predicated region
    $region6: #{tpu_custom_call.1} parent=1 // pred_check
      _
    $region7: #{tpu_custom_call.1} parent=1 // pred_check_branch
      %26 = sbr.rel (0) target = $region9
    $region8: #{tpu_custom_call.1} parent=1 // pred_region
      %s28 = ssub.s32 1024, 1024
      %29 = vsyncadd [#allocation6], %s28
      %s30 = sshll.u32 [#allocation5], 4
      %s31 = int_to_ptr.vmem [resolvable:$true] %s30
      %36 = dma.hbm_to_vmem [thread:$0]  %s1, 1024, %s31, [#allocation6], 64, 64, 4
    $region9: #{tpu_custom_call.1} parent=1 // pred_fallthru
      _
    // Predicated region
    $region10: #{tpu_custom_call.1} parent=1 // pred_check
      _
    $region11: #{tpu_custom_call.1} parent=1 // pred_check_branch
      %38 = sbr.rel (0) target = $region13
    $region12: #{tpu_custom_call.1} parent=1 // pred_region
      %39 = dma.done [#allocation3], 1024
    $region13: #{tpu_custom_call.1} parent=1 // pred_fallthru
      _
    // Predicated region
    $region14: #{tpu_custom_call.1} parent=1 // pred_check
      _
    $region15: #{tpu_custom_call.1} parent=1 // pred_check_branch
      %41 = sbr.rel (0) target = $region17
    $region16: #{tpu_custom_call.1} parent=1 // pred_region
      %42 = dma.done [#allocation6], 1024
    $region17: #{tpu_custom_call.1} parent=1 // pred_fallthru
      _
    %s44 = smul.u32 0, 128
    %v45 = vld [vmem:[#allocation5] sm:$0xf]
    %v46 = vld [vmem:[#allocation5 + $0x4] sm:$0xf]
    %v47 = vld [vmem:[#allocation5 + $0x8] sm:$0xf]
    %v48 = vld [vmem:[#allocation5 + $0xc] sm:$0xf]
    %v49 = vld [vmem:[#allocation5 + $0x10] sm:$0xf]
    %v50 = vld [vmem:[#allocation5 + $0x14] sm:$0xf]
    %v51 = vld [vmem:[#allocation5 + $0x18] sm:$0xf]
    %v52 = vld [vmem:[#allocation5 + $0x1c] sm:$0xf]
    %v53 = vld [vmem:[#allocation5 + $0x20] sm:$0xf]
    %v54 = vld [vmem:[#allocation5 + $0x24] sm:$0xf]
    %v55 = vld [vmem:[#allocation5 + $0x28] sm:$0xf]
    %v56 = vld [vmem:[#allocation5 + $0x2c] sm:$0xf]
    %v57 = vld [vmem:[#allocation5 + $0x30] sm:$0xf]
    %v58 = vld [vmem:[#allocation5 + $0x34] sm:$0xf]
    %v59 = vld [vmem:[#allocation5 + $0x38] sm:$0xf]
    %v60 = vld [vmem:[#allocation5 + $0x3c] sm:$0xf]
    %s61 = sshra.s32 %s44, 3
    %s62 = sand.u32 %s44, 7
    %s63 = smul.addr %s61, 4
    %s64 = scalar_lea.vmem [#allocation5], %s63
    %v65 = vld [vmem:[%s64] sm:$0xf]
    %v66 = vld [vmem:[%s64 + $0x4] sm:$0xf]
    %v67 = vld [vmem:[%s64 + $0x8] sm:$0xf]
    %v68 = vld [vmem:[%s64 + $0xc] sm:$0xf]
    %v69 = vld [vmem:[%s64 + $0x10] sm:$0xf]
    %v70 = vld [vmem:[%s64 + $0x14] sm:$0xf]
    %v71 = vld [vmem:[%s64 + $0x18] sm:$0xf]
    %v72 = vld [vmem:[%s64 + $0x1c] sm:$0xf]
    %v73 = vld [vmem:[%s64 + $0x20] sm:$0xf]
    %v74 = vld [vmem:[%s64 + $0x24] sm:$0xf]
    %v75 = vld [vmem:[%s64 + $0x28] sm:$0xf]
    %v76 = vld [vmem:[%s64 + $0x2c] sm:$0xf]
    %v77 = vld [vmem:[%s64 + $0x30] sm:$0xf]
    %v78 = vld [vmem:[%s64 + $0x34] sm:$0xf]
    %v79 = vld [vmem:[%s64 + $0x38] sm:$0xf]
    %v80 = vld [vmem:[%s64 + $0x3c] sm:$0xf]
    %v97 = vunpack.c.l.b16 %v65
    %v98 = vunpack.c.l.b16 %v66
    %v99 = vunpack.c.l.b16 %v67
    %v100 = vunpack.c.l.b16 %v68
    %v101 = vunpack.c.l.b16 %v69
    %v102 = vunpack.c.l.b16 %v70
    %v103 = vunpack.c.l.b16 %v71
    %v104 = vunpack.c.l.b16 %v72
    %v105 = vunpack.c.l.b16 %v73
    %v106 = vunpack.c.l.b16 %v74
    %v107 = vunpack.c.l.b16 %v75
    %v108 = vunpack.c.l.b16 %v76
    %v109 = vunpack.c.l.b16 %v77
    %v110 = vunpack.c.l.b16 %v78
    %v111 = vunpack.c.l.b16 %v79
    %v112 = vunpack.c.l.b16 %v80
    %v113 = vpack.c.b16 %v98, %v97
    %v114 = vpack.c.b16 %v100, %v99
    %v115 = vpack.c.b16 %v102, %v101
    %v116 = vpack.c.b16 %v104, %v103
    %v117 = vpack.c.b16 %v106, %v105
    %v118 = vpack.c.b16 %v108, %v107
    %v119 = vpack.c.b16 %v110, %v109
    %v120 = vpack.c.b16 %v112, %v111
    %v145 = vunpack.c.l.b16 %v45
    %v146 = vunpack.c.l.b16 %v46
    %v147 = vunpack.c.l.b16 %v47
    %v148 = vunpack.c.l.b16 %v48
    %v149 = vunpack.c.l.b16 %v49
    %v150 = vunpack.c.l.b16 %v50
    %v151 = vunpack.c.l.b16 %v51
    %v152 = vunpack.c.l.b16 %v52
    %v153 = vunpack.c.l.b16 %v53
    %v154 = vunpack.c.l.b16 %v54
    %v155 = vunpack.c.l.b16 %v55
    %v156 = vunpack.c.l.b16 %v56
    %v157 = vunpack.c.l.b16 %v57
    %v158 = vunpack.c.l.b16 %v58
    %v159 = vunpack.c.l.b16 %v59
    %v160 = vunpack.c.l.b16 %v60
    %v161 = vpack.c.b16 %v146, %v145
    %v162 = vpack.c.b16 %v148, %v147
    %v163 = vpack.c.b16 %v150, %v149
    %v164 = vpack.c.b16 %v152, %v151
    %v165 = vpack.c.b16 %v154, %v153
    %v166 = vpack.c.b16 %v156, %v155
    %v167 = vpack.c.b16 %v158, %v157
    %v168 = vpack.c.b16 %v160, %v159
    %177 = vmatprep.subr.bf16.mxu0 0
    %178 = vmatpush1.bf16.xpose.msra.mxu0 %v168
    %179 = vmatprep.subr.bf16.mxu0 0
    %180 = vmatpush1.bf16.xpose.msra.mxu0 %v167
    %181 = vmatprep.subr.bf16.mxu0 0
    %182 = vmatpush1.bf16.xpose.msra.mxu0 %v166
    %183 = vmatprep.subr.bf16.mxu0 0
    %184 = vmatpush1.bf16.xpose.msra.mxu0 %v165
    %185 = vmatprep.subr.bf16.mxu0 0
    %186 = vmatpush1.bf16.xpose.msra.mxu0 %v164
    %187 = vmatprep.subr.bf16.mxu0 0
    %188 = vmatpush1.bf16.xpose.msra.mxu0 %v163
    %189 = vmatprep.subr.bf16.mxu0 0
    %190 = vmatpush1.bf16.xpose.msra.mxu0 %v162
    %191 = vmatprep.subr.bf16.mxu0 0
    %192 = vmatpush1.bf16.xpose.msra.mxu0 %v161
    %193 = vmatprep.subr.bf16.mxu0 0
    %194 = vmatpush2.bf16.xpose.msra.mxu0 0
    %195 = vmatprep.subr.bf16.mxu0 0
    %196 = vmatpush2.bf16.xpose.msra.mxu0 0
    %197 = vmatprep.subr.bf16.mxu0 0
    %198 = vmatpush2.bf16.xpose.msra.mxu0 0
    %199 = vmatprep.subr.bf16.mxu0 0
    %200 = vmatpush2.bf16.xpose.msra.mxu0 0
    %201 = vmatprep.subr.bf16.mxu0 0
    %202 = vmatpush2.bf16.xpose.msra.mxu0 0
    %203 = vmatprep.subr.bf16.mxu0 0
    %204 = vmatpush2.bf16.xpose.msra.mxu0 0
    %205 = vmatprep.subr.bf16.mxu0 0
    %206 = vmatpush2.bf16.xpose.msra.mxu0 0
    %207 = vmatprep.subr.bf16.mxu0 0
    %208 = vmatpush2.bf16.xpose.msra.mxu0 0
    %209 = vmatprep.mubr.bf16.mxu0 0
    %210 = vmatmul.mubr.bf16.gmra.mxu0 %v113
    %v211 = vpop.f32.mrf.mxu0
    %v212 = vadd.f32 0.0, %v211
    %v213 = vpop.f32.mrf.mxu0
    %v214 = vpop.f32.mrf.mxu0
    %v215 = vadd.f32 0.0, %v214
    %v216 = vpop.f32.mrf.mxu0
    %217 = vmatprep.mubr.bf16.mxu0 0
    %218 = vmatmul.mubr.bf16.gmra.mxu0 %v114
    %v219 = vpop.f32.mrf.mxu0
    %v220 = vadd.f32 0.0, %v219
    %v221 = vpop.f32.mrf.mxu0
    %v222 = vpop.f32.mrf.mxu0
    %v223 = vadd.f32 0.0, %v222
    %v224 = vpop.f32.mrf.mxu0
    %225 = vmatprep.mubr.bf16.mxu0 0
    %226 = vmatmul.mubr.bf16.gmra.mxu0 %v115
    %v227 = vpop.f32.mrf.mxu0
    %v228 = vadd.f32 0.0, %v227
    %v229 = vpop.f32.mrf.mxu0
    %v230 = vpop.f32.mrf.mxu0
    %v231 = vadd.f32 0.0, %v230
    %v232 = vpop.f32.mrf.mxu0
    %233 = vmatprep.mubr.bf16.mxu0 0
    %234 = vmatmul.mubr.bf16.gmra.mxu0 %v116
    %v235 = vpop.f32.mrf.mxu0
    %v236 = vadd.f32 0.0, %v235
    %v237 = vpop.f32.mrf.mxu0
    %v238 = vpop.f32.mrf.mxu0
    %v239 = vadd.f32 0.0, %v238
    %v240 = vpop.f32.mrf.mxu0
    %241 = vmatprep.mubr.bf16.mxu0 0
    %242 = vmatmul.mubr.bf16.gmra.mxu0 %v117
    %v243 = vpop.f32.mrf.mxu0
    %v244 = vadd.f32 0.0, %v243
    %v245 = vpop.f32.mrf.mxu0
    %v246 = vpop.f32.mrf.mxu0
    %v247 = vadd.f32 0.0, %v246
    %v248 = vpop.f32.mrf.mxu0
    %249 = vmatprep.mubr.bf16.mxu0 0
    %250 = vmatmul.mubr.bf16.gmra.mxu0 %v118
    %v251 = vpop.f32.mrf.mxu0
    %v252 = vadd.f32 0.0, %v251
    %v253 = vpop.f32.mrf.mxu0
    %v254 = vpop.f32.mrf.mxu0
    %v255 = vadd.f32 0.0, %v254
    %v256 = vpop.f32.mrf.mxu0
    %257 = vmatprep.mubr.bf16.mxu0 0
    %258 = vmatmul.mubr.bf16.gmra.mxu0 %v119
    %v259 = vpop.f32.mrf.mxu0
    %v260 = vadd.f32 0.0, %v259
    %v261 = vpop.f32.mrf.mxu0
    %v262 = vpop.f32.mrf.mxu0
    %v263 = vadd.f32 0.0, %v262
    %v264 = vpop.f32.mrf.mxu0
    %265 = vmatprep.mubr.bf16.mxu0 0
    %266 = vmatmul.mubr.bf16.gmra.mxu0 %v120
    %v267 = vpop.f32.mrf.mxu0
    %v268 = vadd.f32 0.0, %v267
    %v269 = vpop.f32.mrf.mxu0
    %v270 = vpop.f32.mrf.mxu0
    %v271 = vadd.f32 0.0, %v270
    %v272 = vpop.f32.mrf.mxu0
    %273 = vdwg.mxu0
    %v274 = vlaneseq
    %v275 = vshrl.u32 %v274, 7
    %v276 = vadd.s32 %v275, 8
    %v277 = vadd.s32 %v275, 16
    %v278 = vadd.s32 %v275, 24
    %v279 = vadd.s32 %v275, 32
    %v280 = vadd.s32 %v275, 40
    %v281 = vadd.s32 %v275, 48
    %v282 = vadd.s32 %v275, 56
    %v283 = vadd.s32 %v275, 64
    %v284 = vadd.s32 %v275, 72
    %v285 = vadd.s32 %v275, 80
    %v286 = vadd.s32 %v275, 88
    %v287 = vadd.s32 %v275, 96
    %v288 = vadd.s32 %v275, 104
    %v289 = vadd.s32 %v275, 112
    %v290 = vadd.s32 %v275, 120
    %v291 = vstv %s44
    %v292 = vadd.s32 %v275, %v291
    %v293 = vadd.s32 %v276, %v291
    %v294 = vadd.s32 %v277, %v291
    %v295 = vadd.s32 %v278, %v291
    %v296 = vadd.s32 %v279, %v291
    %v297 = vadd.s32 %v280, %v291
    %v298 = vadd.s32 %v281, %v291
    %v299 = vadd.s32 %v282, %v291
    %v300 = vadd.s32 %v283, %v291
    %v301 = vadd.s32 %v284, %v291
    %v302 = vadd.s32 %v285, %v291
    %v303 = vadd.s32 %v286, %v291
    %v304 = vadd.s32 %v287, %v291
    %v305 = vadd.s32 %v288, %v291
    %v306 = vadd.s32 %v289, %v291
    %v307 = vadd.s32 %v290, %v291
    %v308 = vlaneseq
    %v309 = vand.u32 %v308, 127
    %vm310 = vcmp.eq.s32.totalorder %v292, %v309
    %vm311 = vcmp.eq.s32.totalorder %v293, %v309
    %vm312 = vcmp.eq.s32.totalorder %v294, %v309
    %vm313 = vcmp.eq.s32.totalorder %v295, %v309
    %vm314 = vcmp.eq.s32.totalorder %v296, %v309
    %vm315 = vcmp.eq.s32.totalorder %v297, %v309
    %vm316 = vcmp.eq.s32.totalorder %v298, %v309
    %vm317 = vcmp.eq.s32.totalorder %v299, %v309
    %vm318 = vcmp.eq.s32.totalorder %v300, %v309
    %vm319 = vcmp.eq.s32.totalorder %v301, %v309
    %vm320 = vcmp.eq.s32.totalorder %v302, %v309
    %vm321 = vcmp.eq.s32.totalorder %v303, %v309
    %vm322 = vcmp.eq.s32.totalorder %v304, %v309
    %vm323 = vcmp.eq.s32.totalorder %v305, %v309
    %vm324 = vcmp.eq.s32.totalorder %v306, %v309
    %vm325 = vcmp.eq.s32.totalorder %v307, %v309
    %v326 = vsel %vm310, -10.0, %v212
    %v327 = vsel %vm311, -10.0, %v215
    %v328 = vsel %vm312, -10.0, %v220
    %v329 = vsel %vm313, -10.0, %v223
    %v330 = vsel %vm314, -10.0, %v228
    %v331 = vsel %vm315, -10.0, %v231
    %v332 = vsel %vm316, -10.0, %v236
    %v333 = vsel %vm317, -10.0, %v239
    %v334 = vsel %vm318, -10.0, %v244
    %v335 = vsel %vm319, -10.0, %v247
    %v336 = vsel %vm320, -10.0, %v252
    %v337 = vsel %vm321, -10.0, %v255
    %v338 = vsel %vm322, -10.0, %v260
    %v339 = vsel %vm323, -10.0, %v263
    %v340 = vsel %vm324, -10.0, %v268
    %v341 = vsel %vm325, -10.0, %v271
    %v342 = vmul.f32 %v326, 0.022727273
    %v343 = vmul.f32 %v327, 0.022727273
    %v344 = vmul.f32 %v328, 0.022727273
    %v345 = vmul.f32 %v329, 0.022727273
    %v346 = vmul.f32 %v330, 0.022727273
    %v347 = vmul.f32 %v331, 0.022727273
    %v348 = vmul.f32 %v332, 0.022727273
    %v349 = vmul.f32 %v333, 0.022727273
    %v350 = vmul.f32 %v334, 0.022727273
    %v351 = vmul.f32 %v335, 0.022727273
    %v352 = vmul.f32 %v336, 0.022727273
    %v353 = vmul.f32 %v337, 0.022727273
    %v354 = vmul.f32 %v338, 0.022727273
    %v355 = vmul.f32 %v339, 0.022727273
    %v356 = vmul.f32 %v340, 0.022727273
    %v357 = vmul.f32 %v341, 0.022727273
    %358 = vmax.xlane.f32.xlu0 %v342
    %v359 = vpop.xlane.xlu0 %358
    %360 = vmax.xlane.f32.xlu0 %v343
    %v361 = vpop.xlane.xlu0 %360
    %362 = vmax.xlane.f32.xlu0 %v344
    %v363 = vpop.xlane.xlu0 %362
    %364 = vmax.xlane.f32.xlu0 %v345
    %v365 = vpop.xlane.xlu0 %364
    %366 = vmax.xlane.f32.xlu0 %v346
    %v367 = vpop.xlane.xlu0 %366
    %368 = vmax.xlane.f32.xlu0 %v347
    %v369 = vpop.xlane.xlu0 %368
    %370 = vmax.xlane.f32.xlu0 %v348
    %v371 = vpop.xlane.xlu0 %370
    %372 = vmax.xlane.f32.xlu0 %v349
    %v373 = vpop.xlane.xlu0 %372
    %374 = vmax.xlane.f32.xlu0 %v350
    %v375 = vpop.xlane.xlu0 %374
    %376 = vmax.xlane.f32.xlu0 %v351
    %v377 = vpop.xlane.xlu0 %376
    %378 = vmax.xlane.f32.xlu0 %v352
    %v379 = vpop.xlane.xlu0 %378
    %380 = vmax.xlane.f32.xlu0 %v353
    %v381 = vpop.xlane.xlu0 %380
    %382 = vmax.xlane.f32.xlu0 %v354
    %v383 = vpop.xlane.xlu0 %382
    %384 = vmax.xlane.f32.xlu0 %v355
    %v385 = vpop.xlane.xlu0 %384
    %386 = vmax.xlane.f32.xlu0 %v356
    %v387 = vpop.xlane.xlu0 %386
    %388 = vmax.xlane.f32.xlu0 %v357
    %v389 = vpop.xlane.xlu0 %388
    %v390 = vsub.f32 %v342, %v359
    %v391 = vsub.f32 %v343, %v361
    %v392 = vsub.f32 %v344, %v363
    %v393 = vsub.f32 %v345, %v365
    %v394 = vsub.f32 %v346, %v367
    %v395 = vsub.f32 %v347, %v369
    %v396 = vsub.f32 %v348, %v371
    %v397 = vsub.f32 %v349, %v373
    %v398 = vsub.f32 %v350, %v375
    %v399 = vsub.f32 %v351, %v377
    %v400 = vsub.f32 %v352, %v379
    %v401 = vsub.f32 %v353, %v381
    %v402 = vsub.f32 %v354, %v383
    %v403 = vsub.f32 %v355, %v385
    %v404 = vsub.f32 %v356, %v387
    %v405 = vsub.f32 %v357, %v389
    %v406 = vmul.f32 %v390, 1.442695
    %v407 = vpow.pop %v406
    %v408 = vmul.f32 %v391, 1.442695
    %v409 = vpow.pop %v408
    %v410 = vmul.f32 %v392, 1.442695
    %v411 = vpow.pop %v410
    %v412 = vmul.f32 %v393, 1.442695
    %v413 = vpow.pop %v412
    %v414 = vmul.f32 %v394, 1.442695
    %v415 = vpow.pop %v414
    %v416 = vmul.f32 %v395, 1.442695
    %v417 = vpow.pop %v416
    %v418 = vmul.f32 %v396, 1.442695
    %v419 = vpow.pop %v418
    %v420 = vmul.f32 %v397, 1.442695
    %v421 = vpow.pop %v420
    %v422 = vmul.f32 %v398, 1.442695
    %v423 = vpow.pop %v422
    %v424 = vmul.f32 %v399, 1.442695
    %v425 = vpow.pop %v424
    %v426 = vmul.f32 %v400, 1.442695
    %v427 = vpow.pop %v426
    %v428 = vmul.f32 %v401, 1.442695
    %v429 = vpow.pop %v428
    %v430 = vmul.f32 %v402, 1.442695
    %v431 = vpow.pop %v430
    %v432 = vmul.f32 %v403, 1.442695
    %v433 = vpow.pop %v432
    %v434 = vmul.f32 %v404, 1.442695
    %v435 = vpow.pop %v434
    %v436 = vmul.f32 %v405, 1.442695
    %v437 = vpow.pop %v436
    %v438 = vpack.c.bf16 %v409, %v407
    %v439 = vpack.c.bf16 %v413, %v411
    %v440 = vpack.c.bf16 %v417, %v415
    %v441 = vpack.c.bf16 %v421, %v419
    %v442 = vpack.c.bf16 %v425, %v423
    %v443 = vpack.c.bf16 %v429, %v427
    %v444 = vpack.c.bf16 %v433, %v431
    %v445 = vpack.c.bf16 %v437, %v435
    %v454 = vunpack.c.l.b16 %v438
    %v455 = vunpack.c.h.b16 %v438
    %v456 = vunpack.c.l.b16 %v439
    %v457 = vunpack.c.h.b16 %v439
    %v458 = vunpack.c.l.b16 %v440
    %v459 = vunpack.c.h.b16 %v440
    %v460 = vunpack.c.l.b16 %v441
    %v461 = vunpack.c.h.b16 %v441
    %v462 = vunpack.c.l.b16 %v442
    %v463 = vunpack.c.h.b16 %v442
    %v464 = vunpack.c.l.b16 %v443
    %v465 = vunpack.c.h.b16 %v443
    %v466 = vunpack.c.l.b16 %v444
    %v467 = vunpack.c.h.b16 %v444
    %v468 = vunpack.c.l.b16 %v445
    %v469 = vunpack.c.h.b16 %v445
    %v470 = vpack.c.b16 %v454, %v454
    %v471 = vpack.c.b16 %v455, %v455
    %v472 = vpack.c.b16 %v456, %v456
    %v473 = vpack.c.b16 %v457, %v457
    %v474 = vpack.c.b16 %v458, %v458
    %v475 = vpack.c.b16 %v459, %v459
    %v476 = vpack.c.b16 %v460, %v460
    %v477 = vpack.c.b16 %v461, %v461
    %v478 = vpack.c.b16 %v462, %v462
    %v479 = vpack.c.b16 %v463, %v463
    %v480 = vpack.c.b16 %v464, %v464
    %v481 = vpack.c.b16 %v465, %v465
    %v482 = vpack.c.b16 %v466, %v466
    %v483 = vpack.c.b16 %v467, %v467
    %v484 = vpack.c.b16 %v468, %v468
    %v485 = vpack.c.b16 %v469, %v469
    %502 = vst [vmem:[#allocation8] sm:$0xf] %v470
    %503 = vst [vmem:[#allocation8 + $0x4] sm:$0xf] %v471
    %504 = vst [vmem:[#allocation8 + $0x8] sm:$0xf] %v472
    %505 = vst [vmem:[#allocation8 + $0xc] sm:$0xf] %v473
    %506 = vst [vmem:[#allocation8 + $0x10] sm:$0xf] %v474
    %507 = vst [vmem:[#allocation8 + $0x14] sm:$0xf] %v475
    %508 = vst [vmem:[#allocation8 + $0x18] sm:$0xf] %v476
    %509 = vst [vmem:[#allocation8 + $0x1c] sm:$0xf] %v477
    %510 = vst [vmem:[#allocation8 + $0x20] sm:$0xf] %v478
    %511 = vst [vmem:[#allocation8 + $0x24] sm:$0xf] %v479
    %512 = vst [vmem:[#allocation8 + $0x28] sm:$0xf] %v480
    %513 = vst [vmem:[#allocation8 + $0x2c] sm:$0xf] %v481
    %514 = vst [vmem:[#allocation8 + $0x30] sm:$0xf] %v482
    %515 = vst [vmem:[#allocation8 + $0x34] sm:$0xf] %v483
    %516 = vst [vmem:[#allocation8 + $0x38] sm:$0xf] %v484
    %517 = vst [vmem:[#allocation8 + $0x3c] sm:$0xf] %v485
    %518 = vmax.xlane.f32.xlu0 %v212
    %v519 = vpop.xlane.xlu0 %518
    %520 = vmax.xlane.f32.xlu0 %v215
    %v521 = vpop.xlane.xlu0 %520
    %522 = vmax.xlane.f32.xlu0 %v220
    %v523 = vpop.xlane.xlu0 %522
    %524 = vmax.xlane.f32.xlu0 %v223
    %v525 = vpop.xlane.xlu0 %524
    %526 = vmax.xlane.f32.xlu0 %v228
    %v527 = vpop.xlane.xlu0 %526
    %528 = vmax.xlane.f32.xlu0 %v231
    %v529 = vpop.xlane.xlu0 %528
    %530 = vmax.xlane.f32.xlu0 %v236
    %v531 = vpop.xlane.xlu0 %530
    %532 = vmax.xlane.f32.xlu0 %v239
    %v533 = vpop.xlane.xlu0 %532
    %534 = vmax.xlane.f32.xlu0 %v244
    %v535 = vpop.xlane.xlu0 %534
    %536 = vmax.xlane.f32.xlu0 %v247
    %v537 = vpop.xlane.xlu0 %536
    %538 = vmax.xlane.f32.xlu0 %v252
    %v539 = vpop.xlane.xlu0 %538
    %540 = vmax.xlane.f32.xlu0 %v255
    %v541 = vpop.xlane.xlu0 %540
    %542 = vmax.xlane.f32.xlu0 %v260
    %v543 = vpop.xlane.xlu0 %542
    %544 = vmax.xlane.f32.xlu0 %v263
    %v545 = vpop.xlane.xlu0 %544
    %546 = vmax.xlane.f32.xlu0 %v268
    %v547 = vpop.xlane.xlu0 %546
    %548 = vmax.xlane.f32.xlu0 %v271
    %v549 = vpop.xlane.xlu0 %548
    %v550 = vsub.f32 %v212, %v519
    %v551 = vsub.f32 %v215, %v521
    %v552 = vsub.f32 %v220, %v523
    %v553 = vsub.f32 %v223, %v525
    %v554 = vsub.f32 %v228, %v527
    %v555 = vsub.f32 %v231, %v529
    %v556 = vsub.f32 %v236, %v531
    %v557 = vsub.f32 %v239, %v533
    %v558 = vsub.f32 %v244, %v535
    %v559 = vsub.f32 %v247, %v537
    %v560 = vsub.f32 %v252, %v539
    %v561 = vsub.f32 %v255, %v541
    %v562 = vsub.f32 %v260, %v543
    %v563 = vsub.f32 %v263, %v545
    %v564 = vsub.f32 %v268, %v547
    %v565 = vsub.f32 %v271, %v549
    %v566 = vmul.f32 %v550, 1.442695
    %v567 = vpow.pop %v566
    %v568 = vmul.f32 %v551, 1.442695
    %v569 = vpow.pop %v568
    %v570 = vmul.f32 %v552, 1.442695
    %v571 = vpow.pop %v570
    %v572 = vmul.f32 %v553, 1.442695
    %v573 = vpow.pop %v572
    %v574 = vmul.f32 %v554, 1.442695
    %v575 = vpow.pop %v574
    %v576 = vmul.f32 %v555, 1.442695
    %v577 = vpow.pop %v576
    %v578 = vmul.f32 %v556, 1.442695
    %v579 = vpow.pop %v578
    %v580 = vmul.f32 %v557, 1.442695
    %v581 = vpow.pop %v580
    %v582 = vmul.f32 %v558, 1.442695
    %v583 = vpow.pop %v582
    %v584 = vmul.f32 %v559, 1.442695
    %v585 = vpow.pop %v584
    %v586 = vmul.f32 %v560, 1.442695
    %v587 = vpow.pop %v586
    %v588 = vmul.f32 %v561, 1.442695
    %v589 = vpow.pop %v588
    %v590 = vmul.f32 %v562, 1.442695
    %v591 = vpow.pop %v590
    %v592 = vmul.f32 %v563, 1.442695
    %v593 = vpow.pop %v592
    %v594 = vmul.f32 %v564, 1.442695
    %v595 = vpow.pop %v594
    %v596 = vmul.f32 %v565, 1.442695
    %v597 = vpow.pop %v596
    %598 = vadd.xlane.f32.xlu0 %v567
    %v599 = vpop.xlane.xlu0 %598
    %600 = vadd.xlane.f32.xlu0 %v569
    %v601 = vpop.xlane.xlu0 %600
    %602 = vadd.xlane.f32.xlu0 %v571
    %v603 = vpop.xlane.xlu0 %602
    %604 = vadd.xlane.f32.xlu0 %v573
    %v605 = vpop.xlane.xlu0 %604
    %606 = vadd.xlane.f32.xlu0 %v575
    %v607 = vpop.xlane.xlu0 %606
    %608 = vadd.xlane.f32.xlu0 %v577
    %v609 = vpop.xlane.xlu0 %608
    %610 = vadd.xlane.f32.xlu0 %v579
    %v611 = vpop.xlane.xlu0 %610
    %612 = vadd.xlane.f32.xlu0 %v581
    %v613 = vpop.xlane.xlu0 %612
    %614 = vadd.xlane.f32.xlu0 %v583
    %v615 = vpop.xlane.xlu0 %614
    %616 = vadd.xlane.f32.xlu0 %v585
    %v617 = vpop.xlane.xlu0 %616
    %618 = vadd.xlane.f32.xlu0 %v587
    %v619 = vpop.xlane.xlu0 %618
    %620 = vadd.xlane.f32.xlu0 %v589
    %v621 = vpop.xlane.xlu0 %620
    %622 = vadd.xlane.f32.xlu0 %v591
    %v623 = vpop.xlane.xlu0 %622
    %624 = vadd.xlane.f32.xlu0 %v593
    %v625 = vpop.xlane.xlu0 %624
    %626 = vadd.xlane.f32.xlu0 %v595
    %v627 = vpop.xlane.xlu0 %626
    %628 = vadd.xlane.f32.xlu0 %v597
    %v629 = vpop.xlane.xlu0 %628
    %v630 = vrcp.pop %v599
    %v631 = vrcp.pop %v601
    %v632 = vrcp.pop %v603
    %v633 = vrcp.pop %v605
    %v634 = vrcp.pop %v607
    %v635 = vrcp.pop %v609
    %v636 = vrcp.pop %v611
    %v637 = vrcp.pop %v613
    %v638 = vrcp.pop %v615
    %v639 = vrcp.pop %v617
    %v640 = vrcp.pop %v619
    %v641 = vrcp.pop %v621
    %v642 = vrcp.pop %v623
    %v643 = vrcp.pop %v625
    %v644 = vrcp.pop %v627
    %v645 = vrcp.pop %v629
    %v646 = vmul.f32 %v567, %v630
    %v647 = vmul.f32 %v569, %v631
    %v648 = vmul.f32 %v571, %v632
    %v649 = vmul.f32 %v573, %v633
    %v650 = vmul.f32 %v575, %v634
    %v651 = vmul.f32 %v577, %v635
    %v652 = vmul.f32 %v579, %v636
    %v653 = vmul.f32 %v581, %v637
    %v654 = vmul.f32 %v583, %v638
    %v655 = vmul.f32 %v585, %v639
    %v656 = vmul.f32 %v587, %v640
    %v657 = vmul.f32 %v589, %v641
    %v658 = vmul.f32 %v591, %v642
    %v659 = vmul.f32 %v593, %v643
    %v660 = vmul.f32 %v595, %v644
    %v661 = vmul.f32 %v597, %v645
    %v662 = vlog2.pop %v599
    %v663 = vmul.f32 %v662, 0.6931472
    %v664 = vlog2.pop %v601
    %v665 = vmul.f32 %v664, 0.6931472
    %v666 = vlog2.pop %v603
    %v667 = vmul.f32 %v666, 0.6931472
    %v668 = vlog2.pop %v605
    %v669 = vmul.f32 %v668, 0.6931472
    %v670 = vlog2.pop %v607
    %v671 = vmul.f32 %v670, 0.6931472
    %v672 = vlog2.pop %v609
    %v673 = vmul.f32 %v672, 0.6931472
    %v674 = vlog2.pop %v611
    %v675 = vmul.f32 %v674, 0.6931472
    %v676 = vlog2.pop %v613
    %v677 = vmul.f32 %v676, 0.6931472
    %v678 = vlog2.pop %v615
    %v679 = vmul.f32 %v678, 0.6931472
    %v680 = vlog2.pop %v617
    %v681 = vmul.f32 %v680, 0.6931472
    %v682 = vlog2.pop %v619
    %v683 = vmul.f32 %v682, 0.6931472
    %v684 = vlog2.pop %v621
    %v685 = vmul.f32 %v684, 0.6931472
    %v686 = vlog2.pop %v623
    %v687 = vmul.f32 %v686, 0.6931472
    %v688 = vlog2.pop %v625
    %v689 = vmul.f32 %v688, 0.6931472
    %v690 = vlog2.pop %v627
    %v691 = vmul.f32 %v690, 0.6931472
    %v692 = vlog2.pop %v629
    %v693 = vmul.f32 %v692, 0.6931472
    %v694 = vsub.f32 %v550, %v663
    %v695 = vsub.f32 %v551, %v665
    %v696 = vsub.f32 %v552, %v667
    %v697 = vsub.f32 %v553, %v669
    %v698 = vsub.f32 %v554, %v671
    %v699 = vsub.f32 %v555, %v673
    %v700 = vsub.f32 %v556, %v675
    %v701 = vsub.f32 %v557, %v677
    %v702 = vsub.f32 %v558, %v679
    %v703 = vsub.f32 %v559, %v681
    %v704 = vsub.f32 %v560, %v683
    %v705 = vsub.f32 %v561, %v685
    %v706 = vsub.f32 %v562, %v687
    %v707 = vsub.f32 %v563, %v689
    %v708 = vsub.f32 %v564, %v691
    %v709 = vsub.f32 %v565, %v693
    %v710 = vmul.f32 %v646, %v694
    %v711 = vmul.f32 %v647, %v695
    %v712 = vmul.f32 %v648, %v696
    %v713 = vmul.f32 %v649, %v697
    %v714 = vmul.f32 %v650, %v698
    %v715 = vmul.f32 %v651, %v699
    %v716 = vmul.f32 %v652, %v700
    %v717 = vmul.f32 %v653, %v701
    %v718 = vmul.f32 %v654, %v702
    %v719 = vmul.f32 %v655, %v703
    %v720 = vmul.f32 %v656, %v704
    %v721 = vmul.f32 %v657, %v705
    %v722 = vmul.f32 %v658, %v706
    %v723 = vmul.f32 %v659, %v707
    %v724 = vmul.f32 %v660, %v708
    %v725 = vmul.f32 %v661, %v709
    %v726 = vadd.f32 %v710, %v711
    %v727 = vadd.f32 %v726, %v712
    %v728 = vadd.f32 %v727, %v713
    %v729 = vadd.f32 %v728, %v714
    %v730 = vadd.f32 %v729, %v715
    %v731 = vadd.f32 %v730, %v716
    %v732 = vadd.f32 %v731, %v717
    %v733 = vadd.f32 %v732, %v718
    %v734 = vadd.f32 %v733, %v719
    %v735 = vadd.f32 %v734, %v720
    %v736 = vadd.f32 %v735, %v721
    %v737 = vadd.f32 %v736, %v722
    %v738 = vadd.f32 %v737, %v723
    %v739 = vadd.f32 %v738, %v724
    %v740 = vadd.f32 %v739, %v725
    %741 = vadd.xlane.f32.xlu0 %v740
    %v742 = vpop.xlane.xlu0 %741
    %v743 = vrot.slane %v742, 4
    %v744 = vadd.f32 %v742, %v743
    %v745 = vrot.slane %v744, 2
    %v746 = vadd.f32 %v744, %v745
    %v747 = vrot.slane %v746, 1
    %v748 = vadd.f32 %v746, %v747
    %s749 = vtos %v748
    %v750 = vld [vmem:[#allocation2] sm:$0xf]
    %v751 = vld [vmem:[#allocation2 + $0x4] sm:$0xf]
    %v752 = vld [vmem:[#allocation2 + $0x8] sm:$0xf]
    %v753 = vld [vmem:[#allocation2 + $0xc] sm:$0xf]
    %v754 = vld [vmem:[#allocation2 + $0x10] sm:$0xf]
    %v755 = vld [vmem:[#allocation2 + $0x14] sm:$0xf]
    %v756 = vld [vmem:[#allocation2 + $0x18] sm:$0xf]
    %v757 = vld [vmem:[#allocation2 + $0x1c] sm:$0xf]
    %v758 = vld [vmem:[#allocation2 + $0x20] sm:$0xf]
    %v759 = vld [vmem:[#allocation2 + $0x24] sm:$0xf]
    %v760 = vld [vmem:[#allocation2 + $0x28] sm:$0xf]
    %v761 = vld [vmem:[#allocation2 + $0x2c] sm:$0xf]
    %v762 = vld [vmem:[#allocation2 + $0x30] sm:$0xf]
    %v763 = vld [vmem:[#allocation2 + $0x34] sm:$0xf]
    %v764 = vld [vmem:[#allocation2 + $0x38] sm:$0xf]
    %v765 = vld [vmem:[#allocation2 + $0x3c] sm:$0xf]
    %s766 = smul.addr %s61, 4
    %s767 = scalar_lea.vmem [#allocation2], %s766
    %v768 = vld [vmem:[%s767] sm:$0xf]
    %v769 = vld [vmem:[%s767 + $0x4] sm:$0xf]
    %v770 = vld [vmem:[%s767 + $0x8] sm:$0xf]
    %v771 = vld [vmem:[%s767 + $0xc] sm:$0xf]
    %v772 = vld [vmem:[%s767 + $0x10] sm:$0xf]
    %v773 = vld [vmem:[%s767 + $0x14] sm:$0xf]
    %v774 = vld [vmem:[%s767 + $0x18] sm:$0xf]
    %v775 = vld [vmem:[%s767 + $0x1c] sm:$0xf]
    %v776 = vld [vmem:[%s767 + $0x20] sm:$0xf]
    %v777 = vld [vmem:[%s767 + $0x24] sm:$0xf]
    %v778 = vld [vmem:[%s767 + $0x28] sm:$0xf]
    %v779 = vld [vmem:[%s767 + $0x2c] sm:$0xf]
    %v780 = vld [vmem:[%s767 + $0x30] sm:$0xf]
    %v781 = vld [vmem:[%s767 + $0x34] sm:$0xf]
    %v782 = vld [vmem:[%s767 + $0x38] sm:$0xf]
    %v783 = vld [vmem:[%s767 + $0x3c] sm:$0xf]
    %v800 = vunpack.c.l.b16 %v768
    %v801 = vunpack.c.l.b16 %v769
    %v802 = vunpack.c.l.b16 %v770
    %v803 = vunpack.c.l.b16 %v771
    %v804 = vunpack.c.l.b16 %v772
    %v805 = vunpack.c.l.b16 %v773
    %v806 = vunpack.c.l.b16 %v774
    %v807 = vunpack.c.l.b16 %v775
    %v808 = vunpack.c.l.b16 %v776
    %v809 = vunpack.c.l.b16 %v777
    %v810 = vunpack.c.l.b16 %v778
    %v811 = vunpack.c.l.b16 %v779
    %v812 = vunpack.c.l.b16 %v780
    %v813 = vunpack.c.l.b16 %v781
    %v814 = vunpack.c.l.b16 %v782
    %v815 = vunpack.c.l.b16 %v783
    %v816 = vpack.c.b16 %v801, %v800
    %v817 = vpack.c.b16 %v803, %v802
    %v818 = vpack.c.b16 %v805, %v804
    %v819 = vpack.c.b16 %v807, %v806
    %v820 = vpack.c.b16 %v809, %v808
    %v821 = vpack.c.b16 %v811, %v810
    %v822 = vpack.c.b16 %v813, %v812
    %v823 = vpack.c.b16 %v815, %v814
    %v848 = vunpack.c.l.b16 %v750
    %v849 = vunpack.c.l.b16 %v751
    %v850 = vunpack.c.l.b16 %v752
    %v851 = vunpack.c.l.b16 %v753
    %v852 = vunpack.c.l.b16 %v754
    %v853 = vunpack.c.l.b16 %v755
    %v854 = vunpack.c.l.b16 %v756
    %v855 = vunpack.c.l.b16 %v757
    %v856 = vunpack.c.l.b16 %v758
    %v857 = vunpack.c.l.b16 %v759
    %v858 = vunpack.c.l.b16 %v760
    %v859 = vunpack.c.l.b16 %v761
    %v860 = vunpack.c.l.b16 %v762
    %v861 = vunpack.c.l.b16 %v763
    %v862 = vunpack.c.l.b16 %v764
    %v863 = vunpack.c.l.b16 %v765
    %v864 = vpack.c.b16 %v849, %v848
    %v865 = vpack.c.b16 %v851, %v850
    %v866 = vpack.c.b16 %v853, %v852
    %v867 = vpack.c.b16 %v855, %v854
    %v868 = vpack.c.b16 %v857, %v856
    %v869 = vpack.c.b16 %v859, %v858
    %v870 = vpack.c.b16 %v861, %v860
    %v871 = vpack.c.b16 %v863, %v862
    %880 = vmatprep.subr.bf16.mxu0 0
    %881 = vmatpush1.bf16.xpose.msra.mxu0 %v871
    %882 = vmatprep.subr.bf16.mxu0 0
    %883 = vmatpush1.bf16.xpose.msra.mxu0 %v870
    %884 = vmatprep.subr.bf16.mxu0 0
    %885 = vmatpush1.bf16.xpose.msra.mxu0 %v869
    %886 = vmatprep.subr.bf16.mxu0 0
    %887 = vmatpush1.bf16.xpose.msra.mxu0 %v868
    %888 = vmatprep.subr.bf16.mxu0 0
    %889 = vmatpush1.bf16.xpose.msra.mxu0 %v867
    %890 = vmatprep.subr.bf16.mxu0 0
    %891 = vmatpush1.bf16.xpose.msra.mxu0 %v866
    %892 = vmatprep.subr.bf16.mxu0 0
    %893 = vmatpush1.bf16.xpose.msra.mxu0 %v865
    %894 = vmatprep.subr.bf16.mxu0 0
    %895 = vmatpush1.bf16.xpose.msra.mxu0 %v864
    %896 = vmatprep.subr.bf16.mxu0 0
    %897 = vmatpush2.bf16.xpose.msra.mxu0 0
    %898 = vmatprep.subr.bf16.mxu0 0
    %899 = vmatpush2.bf16.xpose.msra.mxu0 0
    %900 = vmatprep.subr.bf16.mxu0 0
    %901 = vmatpush2.bf16.xpose.msra.mxu0 0
    %902 = vmatprep.subr.bf16.mxu0 0
    %903 = vmatpush2.bf16.xpose.msra.mxu0 0
    %904 = vmatprep.subr.bf16.mxu0 0
    %905 = vmatpush2.bf16.xpose.msra.mxu0 0
    %906 = vmatprep.subr.bf16.mxu0 0
    %907 = vmatpush2.bf16.xpose.msra.mxu0 0
    %908 = vmatprep.subr.bf16.mxu0 0
    %909 = vmatpush2.bf16.xpose.msra.mxu0 0
    %910 = vmatprep.subr.bf16.mxu0 0
    %911 = vmatpush2.bf16.xpose.msra.mxu0 0
    %912 = vmatprep.mubr.bf16.mxu0 0
    %913 = vmatmul.mubr.bf16.gmra.mxu0 %v816
    %v914 = vpop.f32.mrf.mxu0
    %v915 = vadd.f32 0.0, %v914
    %v916 = vpop.f32.mrf.mxu0
    %v917 = vpop.f32.mrf.mxu0
    %v918 = vadd.f32 0.0, %v917
    %v919 = vpop.f32.mrf.mxu0
    %920 = vmatprep.mubr.bf16.mxu0 0
    %921 = vmatmul.mubr.bf16.gmra.mxu0 %v817
    %v922 = vpop.f32.mrf.mxu0
    %v923 = vadd.f32 0.0, %v922
    %v924 = vpop.f32.mrf.mxu0
    %v925 = vpop.f32.mrf.mxu0
    %v926 = vadd.f32 0.0, %v925
    %v927 = vpop.f32.mrf.mxu0
    %928 = vmatprep.mubr.bf16.mxu0 0
    %929 = vmatmul.mubr.bf16.gmra.mxu0 %v818
    %v930 = vpop.f32.mrf.mxu0
    %v931 = vadd.f32 0.0, %v930
    %v932 = vpop.f32.mrf.mxu0
    %v933 = vpop.f32.mrf.mxu0
    %v934 = vadd.f32 0.0, %v933
    %v935 = vpop.f32.mrf.mxu0
    %936 = vmatprep.mubr.bf16.mxu0 0
    %937 = vmatmul.mubr.bf16.gmra.mxu0 %v819
    %v938 = vpop.f32.mrf.mxu0
    %v939 = vadd.f32 0.0, %v938
    %v940 = vpop.f32.mrf.mxu0
    %v941 = vpop.f32.mrf.mxu0
    %v942 = vadd.f32 0.0, %v941
    %v943 = vpop.f32.mrf.mxu0
    %944 = vmatprep.mubr.bf16.mxu0 0
    %945 = vmatmul.mubr.bf16.gmra.mxu0 %v820
    %v946 = vpop.f32.mrf.mxu0
    %v947 = vadd.f32 0.0, %v946
    %v948 = vpop.f32.mrf.mxu0
    %v949 = vpop.f32.mrf.mxu0
    %v950 = vadd.f32 0.0, %v949
    %v951 = vpop.f32.mrf.mxu0
    %952 = vmatprep.mubr.bf16.mxu0 0
    %953 = vmatmul.mubr.bf16.gmra.mxu0 %v821
    %v954 = vpop.f32.mrf.mxu0
    %v955 = vadd.f32 0.0, %v954
    %v956 = vpop.f32.mrf.mxu0
    %v957 = vpop.f32.mrf.mxu0
    %v958 = vadd.f32 0.0, %v957
    %v959 = vpop.f32.mrf.mxu0
    %960 = vmatprep.mubr.bf16.mxu0 0
    %961 = vmatmul.mubr.bf16.gmra.mxu0 %v822
    %v962 = vpop.f32.mrf.mxu0
    %v963 = vadd.f32 0.0, %v962
    %v964 = vpop.f32.mrf.mxu0
    %v965 = vpop.f32.mrf.mxu0
    %v966 = vadd.f32 0.0, %v965
    %v967 = vpop.f32.mrf.mxu0
    %968 = vmatprep.mubr.bf16.mxu0 0
    %969 = vmatmul.mubr.bf16.gmra.mxu0 %v823
    %v970 = vpop.f32.mrf.mxu0
    %v971 = vadd.f32 0.0, %v970
    %v972 = vpop.f32.mrf.mxu0
    %v973 = vpop.f32.mrf.mxu0
    %v974 = vadd.f32 0.0, %v973
    %v975 = vpop.f32.mrf.mxu0
    %976 = vdwg.mxu0
    %977 = vmax.xlane.f32.xlu0 %v915
    %v978 = vpop.xlane.xlu0 %977
    %979 = vmax.xlane.f32.xlu0 %v918
    %v980 = vpop.xlane.xlu0 %979
    %981 = vmax.xlane.f32.xlu0 %v923
    %v982 = vpop.xlane.xlu0 %981
    %983 = vmax.xlane.f32.xlu0 %v926
    %v984 = vpop.xlane.xlu0 %983
    %985 = vmax.xlane.f32.xlu0 %v931
    %v986 = vpop.xlane.xlu0 %985
    %987 = vmax.xlane.f32.xlu0 %v934
    %v988 = vpop.xlane.xlu0 %987
    %989 = vmax.xlane.f32.xlu0 %v939
    %v990 = vpop.xlane.xlu0 %989
    %991 = vmax.xlane.f32.xlu0 %v942
    %v992 = vpop.xlane.xlu0 %991
    %993 = vmax.xlane.f32.xlu0 %v947
    %v994 = vpop.xlane.xlu0 %993
    %995 = vmax.xlane.f32.xlu0 %v950
    %v996 = vpop.xlane.xlu0 %995
    %997 = vmax.xlane.f32.xlu0 %v955
    %v998 = vpop.xlane.xlu0 %997
    %999 = vmax.xlane.f32.xlu0 %v958
    %v1000 = vpop.xlane.xlu0 %999
    %1001 = vmax.xlane.f32.xlu0 %v963
    %v1002 = vpop.xlane.xlu0 %1001
    %1003 = vmax.xlane.f32.xlu0 %v966
    %v1004 = vpop.xlane.xlu0 %1003
    %1005 = vmax.xlane.f32.xlu0 %v971
    %v1006 = vpop.xlane.xlu0 %1005
    %1007 = vmax.xlane.f32.xlu0 %v974
    %v1008 = vpop.xlane.xlu0 %1007
    %v1009 = vsub.f32 %v915, %v978
    %v1010 = vsub.f32 %v918, %v980
    %v1011 = vsub.f32 %v923, %v982
    %v1012 = vsub.f32 %v926, %v984
    %v1013 = vsub.f32 %v931, %v986
    %v1014 = vsub.f32 %v934, %v988
    %v1015 = vsub.f32 %v939, %v990
    %v1016 = vsub.f32 %v942, %v992
    %v1017 = vsub.f32 %v947, %v994
    %v1018 = vsub.f32 %v950, %v996
    %v1019 = vsub.f32 %v955, %v998
    %v1020 = vsub.f32 %v958, %v1000
    %v1021 = vsub.f32 %v963, %v1002
    %v1022 = vsub.f32 %v966, %v1004
    %v1023 = vsub.f32 %v971, %v1006
    %v1024 = vsub.f32 %v974, %v1008
    %v1025 = vmul.f32 %v1009, 1.442695
    %v1026 = vpow.pop %v1025
    %v1027 = vmul.f32 %v1010, 1.442695
    %v1028 = vpow.pop %v1027
    %v1029 = vmul.f32 %v1011, 1.442695
    %v1030 = vpow.pop %v1029
    %v1031 = vmul.f32 %v1012, 1.442695
    %v1032 = vpow.pop %v1031
    %v1033 = vmul.f32 %v1013, 1.442695
    %v1034 = vpow.pop %v1033
    %v1035 = vmul.f32 %v1014, 1.442695
    %v1036 = vpow.pop %v1035
    %v1037 = vmul.f32 %v1015, 1.442695
    %v1038 = vpow.pop %v1037
    %v1039 = vmul.f32 %v1016, 1.442695
    %v1040 = vpow.pop %v1039
    %v1041 = vmul.f32 %v1017, 1.442695
    %v1042 = vpow.pop %v1041
    %v1043 = vmul.f32 %v1018, 1.442695
    %v1044 = vpow.pop %v1043
    %v1045 = vmul.f32 %v1019, 1.442695
    %v1046 = vpow.pop %v1045
    %v1047 = vmul.f32 %v1020, 1.442695
    %v1048 = vpow.pop %v1047
    %v1049 = vmul.f32 %v1021, 1.442695
    %v1050 = vpow.pop %v1049
    %v1051 = vmul.f32 %v1022, 1.442695
    %v1052 = vpow.pop %v1051
    %v1053 = vmul.f32 %v1023, 1.442695
    %v1054 = vpow.pop %v1053
    %v1055 = vmul.f32 %v1024, 1.442695
    %v1056 = vpow.pop %v1055
    %1057 = vadd.xlane.f32.xlu0 %v1026
    %v1058 = vpop.xlane.xlu0 %1057
    %1059 = vadd.xlane.f32.xlu0 %v1028
    %v1060 = vpop.xlane.xlu0 %1059
    %1061 = vadd.xlane.f32.xlu0 %v1030
    %v1062 = vpop.xlane.xlu0 %1061
    %1063 = vadd.xlane.f32.xlu0 %v1032
    %v1064 = vpop.xlane.xlu0 %1063
    %1065 = vadd.xlane.f32.xlu0 %v1034
    %v1066 = vpop.xlane.xlu0 %1065
    %1067 = vadd.xlane.f32.xlu0 %v1036
    %v1068 = vpop.xlane.xlu0 %1067
    %1069 = vadd.xlane.f32.xlu0 %v1038
    %v1070 = vpop.xlane.xlu0 %1069
    %1071 = vadd.xlane.f32.xlu0 %v1040
    %v1072 = vpop.xlane.xlu0 %1071
    %1073 = vadd.xlane.f32.xlu0 %v1042
    %v1074 = vpop.xlane.xlu0 %1073
    %1075 = vadd.xlane.f32.xlu0 %v1044
    %v1076 = vpop.xlane.xlu0 %1075
    %1077 = vadd.xlane.f32.xlu0 %v1046
    %v1078 = vpop.xlane.xlu0 %1077
    %1079 = vadd.xlane.f32.xlu0 %v1048
    %v1080 = vpop.xlane.xlu0 %1079
    %1081 = vadd.xlane.f32.xlu0 %v1050
    %v1082 = vpop.xlane.xlu0 %1081
    %1083 = vadd.xlane.f32.xlu0 %v1052
    %v1084 = vpop.xlane.xlu0 %1083
    %1085 = vadd.xlane.f32.xlu0 %v1054
    %v1086 = vpop.xlane.xlu0 %1085
    %1087 = vadd.xlane.f32.xlu0 %v1056
    %v1088 = vpop.xlane.xlu0 %1087
    %v1089 = vrcp.pop %v1058
    %v1090 = vrcp.pop %v1060
    %v1091 = vrcp.pop %v1062
    %v1092 = vrcp.pop %v1064
    %v1093 = vrcp.pop %v1066
    %v1094 = vrcp.pop %v1068
    %v1095 = vrcp.pop %v1070
    %v1096 = vrcp.pop %v1072
    %v1097 = vrcp.pop %v1074
    %v1098 = vrcp.pop %v1076
    %v1099 = vrcp.pop %v1078
    %v1100 = vrcp.pop %v1080
    %v1101 = vrcp.pop %v1082
    %v1102 = vrcp.pop %v1084
    %v1103 = vrcp.pop %v1086
    %v1104 = vrcp.pop %v1088
    %v1105 = vmul.f32 %v1026, %v1089
    %v1106 = vmul.f32 %v1028, %v1090
    %v1107 = vmul.f32 %v1030, %v1091
    %v1108 = vmul.f32 %v1032, %v1092
    %v1109 = vmul.f32 %v1034, %v1093
    %v1110 = vmul.f32 %v1036, %v1094
    %v1111 = vmul.f32 %v1038, %v1095
    %v1112 = vmul.f32 %v1040, %v1096
    %v1113 = vmul.f32 %v1042, %v1097
    %v1114 = vmul.f32 %v1044, %v1098
    %v1115 = vmul.f32 %v1046, %v1099
    %v1116 = vmul.f32 %v1048, %v1100
    %v1117 = vmul.f32 %v1050, %v1101
    %v1118 = vmul.f32 %v1052, %v1102
    %v1119 = vmul.f32 %v1054, %v1103
    %v1120 = vmul.f32 %v1056, %v1104
    %v1121 = vlog2.pop %v1058
    %v1122 = vmul.f32 %v1121, 0.6931472
    %v1123 = vlog2.pop %v1060
    %v1124 = vmul.f32 %v1123, 0.6931472
    %v1125 = vlog2.pop %v1062
    %v1126 = vmul.f32 %v1125, 0.6931472
    %v1127 = vlog2.pop %v1064
    %v1128 = vmul.f32 %v1127, 0.6931472
    %v1129 = vlog2.pop %v1066
    %v1130 = vmul.f32 %v1129, 0.6931472
    %v1131 = vlog2.pop %v1068
    %v1132 = vmul.f32 %v1131, 0.6931472
    %v1133 = vlog2.pop %v1070
    %v1134 = vmul.f32 %v1133, 0.6931472
    %v1135 = vlog2.pop %v1072
    %v1136 = vmul.f32 %v1135, 0.6931472
    %v1137 = vlog2.pop %v1074
    %v1138 = vmul.f32 %v1137, 0.6931472
    %v1139 = vlog2.pop %v1076
    %v1140 = vmul.f32 %v1139, 0.6931472
    %v1141 = vlog2.pop %v1078
    %v1142 = vmul.f32 %v1141, 0.6931472
    %v1143 = vlog2.pop %v1080
    %v1144 = vmul.f32 %v1143, 0.6931472
    %v1145 = vlog2.pop %v1082
    %v1146 = vmul.f32 %v1145, 0.6931472
    %v1147 = vlog2.pop %v1084
    %v1148 = vmul.f32 %v1147, 0.6931472
    %v1149 = vlog2.pop %v1086
    %v1150 = vmul.f32 %v1149, 0.6931472
    %v1151 = vlog2.pop %v1088
    %v1152 = vmul.f32 %v1151, 0.6931472
    %v1153 = vsub.f32 %v1009, %v1122
    %v1154 = vsub.f32 %v1010, %v1124
    %v1155 = vsub.f32 %v1011, %v1126
    %v1156 = vsub.f32 %v1012, %v1128
    %v1157 = vsub.f32 %v1013, %v1130
    %v1158 = vsub.f32 %v1014, %v1132
    %v1159 = vsub.f32 %v1015, %v1134
    %v1160 = vsub.f32 %v1016, %v1136
    %v1161 = vsub.f32 %v1017, %v1138
    %v1162 = vsub.f32 %v1018, %v1140
    %v1163 = vsub.f32 %v1019, %v1142
    %v1164 = vsub.f32 %v1020, %v1144
    %v1165 = vsub.f32 %v1021, %v1146
    %v1166 = vsub.f32 %v1022, %v1148
    %v1167 = vsub.f32 %v1023, %v1150
    %v1168 = vsub.f32 %v1024, %v1152
    %v1169 = vmul.f32 %v1105, %v1153
    %v1170 = vmul.f32 %v1106, %v1154
    %v1171 = vmul.f32 %v1107, %v1155
    %v1172 = vmul.f32 %v1108, %v1156
    %v1173 = vmul.f32 %v1109, %v1157
    %v1174 = vmul.f32 %v1110, %v1158
    %v1175 = vmul.f32 %v1111, %v1159
    %v1176 = vmul.f32 %v1112, %v1160
    %v1177 = vmul.f32 %v1113, %v1161
    %v1178 = vmul.f32 %v1114, %v1162
    %v1179 = vmul.f32 %v1115, %v1163
    %v1180 = vmul.f32 %v1116, %v1164
    %v1181 = vmul.f32 %v1117, %v1165
    %v1182 = vmul.f32 %v1118, %v1166
    %v1183 = vmul.f32 %v1119, %v1167
    %v1184 = vmul.f32 %v1120, %v1168
    %v1185 = vadd.f32 %v1169, %v1170
    %v1186 = vadd.f32 %v1185, %v1171
    %v1187 = vadd.f32 %v1186, %v1172
    %v1188 = vadd.f32 %v1187, %v1173
    %v1189 = vadd.f32 %v1188, %v1174
    %v1190 = vadd.f32 %v1189, %v1175
    %v1191 = vadd.f32 %v1190, %v1176
    %v1192 = vadd.f32 %v1191, %v1177
    %v1193 = vadd.f32 %v1192, %v1178
    %v1194 = vadd.f32 %v1193, %v1179
    %v1195 = vadd.f32 %v1194, %v1180
    %v1196 = vadd.f32 %v1195, %v1181
    %v1197 = vadd.f32 %v1196, %v1182
    %v1198 = vadd.f32 %v1197, %v1183
    %v1199 = vadd.f32 %v1198, %v1184
    %1200 = vadd.xlane.f32.xlu0 %v1199
    %v1201 = vpop.xlane.xlu0 %1200
    %v1202 = vrot.slane %v1201, 4
    %v1203 = vadd.f32 %v1201, %v1202
    %v1204 = vrot.slane %v1203, 2
    %v1205 = vadd.f32 %v1203, %v1204
    %v1206 = vrot.slane %v1205, 1
    %v1207 = vadd.f32 %v1205, %v1206
    %s1208 = vtos %v1207
    %v1209 = vadd.f32 %v1105, %v646
    %v1210 = vadd.f32 %v1106, %v647
    %v1211 = vadd.f32 %v1107, %v648
    %v1212 = vadd.f32 %v1108, %v649
    %v1213 = vadd.f32 %v1109, %v650
    %v1214 = vadd.f32 %v1110, %v651
    %v1215 = vadd.f32 %v1111, %v652
    %v1216 = vadd.f32 %v1112, %v653
    %v1217 = vadd.f32 %v1113, %v654
    %v1218 = vadd.f32 %v1114, %v655
    %v1219 = vadd.f32 %v1115, %v656
    %v1220 = vadd.f32 %v1116, %v657
    %v1221 = vadd.f32 %v1117, %v658
    %v1222 = vadd.f32 %v1118, %v659
    %v1223 = vadd.f32 %v1119, %v660
    %v1224 = vadd.f32 %v1120, %v661
    %v1225 = vmul.f32 %v1209, 0.5
    %v1226 = vmul.f32 %v1210, 0.5
    %v1227 = vmul.f32 %v1211, 0.5
    %v1228 = vmul.f32 %v1212, 0.5
    %v1229 = vmul.f32 %v1213, 0.5
    %v1230 = vmul.f32 %v1214, 0.5
    %v1231 = vmul.f32 %v1215, 0.5
    %v1232 = vmul.f32 %v1216, 0.5
    %v1233 = vmul.f32 %v1217, 0.5
    %v1234 = vmul.f32 %v1218, 0.5
    %v1235 = vmul.f32 %v1219, 0.5
    %v1236 = vmul.f32 %v1220, 0.5
    %v1237 = vmul.f32 %v1221, 0.5
    %v1238 = vmul.f32 %v1222, 0.5
    %v1239 = vmul.f32 %v1223, 0.5
    %v1240 = vmul.f32 %v1224, 0.5
    %v1241 = vmax.f32 %v1225, 1.1754944e-38
    %v1242 = vmax.f32 %v1226, 1.1754944e-38
    %v1243 = vmax.f32 %v1227, 1.1754944e-38
    %v1244 = vmax.f32 %v1228, 1.1754944e-38
    %v1245 = vmax.f32 %v1229, 1.1754944e-38
    %v1246 = vmax.f32 %v1230, 1.1754944e-38
    %v1247 = vmax.f32 %v1231, 1.1754944e-38
    %v1248 = vmax.f32 %v1232, 1.1754944e-38
    %v1249 = vmax.f32 %v1233, 1.1754944e-38
    %v1250 = vmax.f32 %v1234, 1.1754944e-38
    %v1251 = vmax.f32 %v1235, 1.1754944e-38
    %v1252 = vmax.f32 %v1236, 1.1754944e-38
    %v1253 = vmax.f32 %v1237, 1.1754944e-38
    %v1254 = vmax.f32 %v1238, 1.1754944e-38
    %v1255 = vmax.f32 %v1239, 1.1754944e-38
    %v1256 = vmax.f32 %v1240, 1.1754944e-38
    %v1257 = vlog2.pop %v1241
    %v1258 = vmul.f32 %v1257, 0.6931472
    %v1259 = vlog2.pop %v1242
    %v1260 = vmul.f32 %v1259, 0.6931472
    %v1261 = vlog2.pop %v1243
    %v1262 = vmul.f32 %v1261, 0.6931472
    %v1263 = vlog2.pop %v1244
    %v1264 = vmul.f32 %v1263, 0.6931472
    %v1265 = vlog2.pop %v1245
    %v1266 = vmul.f32 %v1265, 0.6931472
    %v1267 = vlog2.pop %v1246
    %v1268 = vmul.f32 %v1267, 0.6931472
    %v1269 = vlog2.pop %v1247
    %v1270 = vmul.f32 %v1269, 0.6931472
    %v1271 = vlog2.pop %v1248
    %v1272 = vmul.f32 %v1271, 0.6931472
    %v1273 = vlog2.pop %v1249
    %v1274 = vmul.f32 %v1273, 0.6931472
    %v1275 = vlog2.pop %v1250
    %v1276 = vmul.f32 %v1275, 0.6931472
    %v1277 = vlog2.pop %v1251
    %v1278 = vmul.f32 %v1277, 0.6931472
    %v1279 = vlog2.pop %v1252
    %v1280 = vmul.f32 %v1279, 0.6931472
    %v1281 = vlog2.pop %v1253
    %v1282 = vmul.f32 %v1281, 0.6931472
    %v1283 = vlog2.pop %v1254
    %v1284 = vmul.f32 %v1283, 0.6931472
    %v1285 = vlog2.pop %v1255
    %v1286 = vmul.f32 %v1285, 0.6931472
    %v1287 = vlog2.pop %v1256
    %v1288 = vmul.f32 %v1287, 0.6931472
    %s1289 = sadd.f32 %s1208, %s749
    %s1290 = smul.f32 %s1289, 0.5
    %v1291 = vmul.f32 %v1225, %v1258
    %v1292 = vmul.f32 %v1226, %v1260
    %v1293 = vmul.f32 %v1227, %v1262
    %v1294 = vmul.f32 %v1228, %v1264
    %v1295 = vmul.f32 %v1229, %v1266
    %v1296 = vmul.f32 %v1230, %v1268
    %v1297 = vmul.f32 %v1231, %v1270
    %v1298 = vmul.f32 %v1232, %v1272
    %v1299 = vmul.f32 %v1233, %v1274
    %v1300 = vmul.f32 %v1234, %v1276
    %v1301 = vmul.f32 %v1235, %v1278
    %v1302 = vmul.f32 %v1236, %v1280
    %v1303 = vmul.f32 %v1237, %v1282
    %v1304 = vmul.f32 %v1238, %v1284
    %v1305 = vmul.f32 %v1239, %v1286
    %v1306 = vmul.f32 %v1240, %v1288
    %v1307 = vadd.f32 %v1291, %v1292
    %v1308 = vadd.f32 %v1307, %v1293
    %v1309 = vadd.f32 %v1308, %v1294
    %v1310 = vadd.f32 %v1309, %v1295
    %v1311 = vadd.f32 %v1310, %v1296
    %v1312 = vadd.f32 %v1311, %v1297
    %v1313 = vadd.f32 %v1312, %v1298
    %v1314 = vadd.f32 %v1313, %v1299
    %v1315 = vadd.f32 %v1314, %v1300
    %v1316 = vadd.f32 %v1315, %v1301
    %v1317 = vadd.f32 %v1316, %v1302
    %v1318 = vadd.f32 %v1317, %v1303
    %v1319 = vadd.f32 %v1318, %v1304
    %v1320 = vadd.f32 %v1319, %v1305
    %v1321 = vadd.f32 %v1320, %v1306
    %1322 = vadd.xlane.f32.xlu0 %v1321
    %v1323 = vpop.xlane.xlu0 %1322
    %v1324 = vrot.slane %v1323, 4
    %v1325 = vadd.f32 %v1323, %v1324
    %v1326 = vrot.slane %v1325, 2
    %v1327 = vadd.f32 %v1325, %v1326
    %v1328 = vrot.slane %v1327, 1
    %v1329 = vadd.f32 %v1327, %v1328
    %s1330 = vtos %v1329
    %s1331 = ssub.f32 %s1290, %s1330
    %v1332 = vstv %s1331
    %v1333 = vadd.f32 %v1332, 0.0
    %1334 = vst [vmem:[#allocation7] sm:$0xff] %v1333
    // Predicated region
    $region18: #{tpu_custom_call.1} parent=1 // pred_check
      _
    $region19: #{tpu_custom_call.1} parent=1 // pred_check_branch
      %1336 = sbr.rel (0) target = $region21
    $region20: #{tpu_custom_call.1} parent=1 // pred_region
      %s1338 = ssub.s32 128, 128
      %1339 = vsyncadd [#allocation4], %s1338
      %s1341 = sshll.u32 [#allocation7], 4
      %s1342 = int_to_ptr.vmem [resolvable:$true] %s1341
      %1344 = dma.vmem_to_hbm [thread:$0]  %s1342, 128, %s2, [#allocation4]
    $region21: #{tpu_custom_call.1} parent=1 // pred_fallthru
      _
    // Predicated region
    $region22: #{tpu_custom_call.1} parent=1 // pred_check
      _
    $region23: #{tpu_custom_call.1} parent=1 // pred_check_branch
      %1346 = sbr.rel (0) target = $region25
    $region24: #{tpu_custom_call.1} parent=1 // pred_region
      %s1348 = ssub.s32 1024, 1024
      %1349 = vsyncadd [#allocation9], %s1348
      %s1350 = sshll.u32 [#allocation8], 4
      %s1351 = int_to_ptr.vmem [resolvable:$true] %s1350
      %1356 = dma.vmem_to_hbm [thread:$0]  %s1351, 1024, %s3, [#allocation9], 64, 64, 4
    $region25: #{tpu_custom_call.1} parent=1 // pred_fallthru
      _
    // Predicated region
    $region26: #{tpu_custom_call.1} parent=1 // pred_check
      _
    $region27: #{tpu_custom_call.1} parent=1 // pred_check_branch
      %1358 = sbr.rel (0) target = $region29
    $region28: #{tpu_custom_call.1} parent=1 // pred_region
      %1359 = dma.done [#allocation4], 128
    $region29: #{tpu_custom_call.1} parent=1 // pred_fallthru
      _
    // Predicated region
    $region30: #{tpu_custom_call.1} parent=1 // pred_check
      _
    $region31: #{tpu_custom_call.1} parent=1 // pred_check_branch
      %1361 = sbr.rel (0) target = $region33
    $region32: #{tpu_custom_call.1} parent=1 // pred_region
      %1362 = dma.done [#allocation9], 1024
    $region33: #{tpu_custom_call.1} parent=1 // pred_fallthru
      _
    %1363 = vsyncpa [#allocation3], 1
    %1364 = vsyncpa [#allocation6], 1
    %1365 = vsyncpa [#allocation4], 1
    %1366 = vsyncpa [#allocation9], 1

</llo_original>
